<compile_context>
chip_gen: v7x
topology: tpu7x:2x2x1
jax: 0.10.0
libtpu: 0.0.40
codegen_flags: <defaults>
</compile_context>

<pallas_src>
import functools

import jax
import jax.numpy as jnp
import numpy as np
from jax.experimental import pallas as pl
from jax.experimental.pallas import tpu as pltpu

IN_DIM = 2
HIDDEN = 20
OUT_DIM = 1
NUM_LAYERS = 6

LANE = 128                 # padded feature width for hidden layers
SUBLANE = 8                # batch alignment
OUT_PAD = 8                # padded output lane width (real output is lane 0)
DEFAULT_BLOCK_ROWS = 1024  # batch tile; v6e can go 2-4K, keep <= ~2K on v7x


def _round_up(n, m):
    return ((n + m - 1) // m) * m


def mlp_kernel(x_ref, w_ref, b_ref, o_ref):
    """One batch tile of the fused 6-layer forward pass.

    x_ref: (TB, 2)          w_ref: (6, 128, 128)  weights in (in, out) layout, zero padded
    b_ref: (6, 1, 128)      o_ref: (TB, 8)        valid output in lane 0
    """
    # Layer 1: fan_in == 2 -> two broadcast mult-adds on the VPU (no MXU pass,
    # no K=2 relayout). Padded lanes (>= HIDDEN) stay exactly zero.
    x0 = x_ref[:, 0:1]                       # (TB, 1)
    x1 = x_ref[:, 1:2]                       # (TB, 1)
    w1 = w_ref[0]                            # (128, 128); rows >= 2 are zero
    h = x0 * w1[0:1, :] + x1 * w1[1:2, :] + b_ref[0]
    h = jnp.maximum(h, 0.0)

    # Layers 2..5: Linear + ReLU on the MXU; weights are VMEM-resident.
    for l in range(1, NUM_LAYERS - 1):
        h = jnp.dot(h, w_ref[l], preferred_element_type=jnp.float32) + b_ref[l]
        h = jnp.maximum(h, 0.0)

    # Output layer: Linear, no activation. Only lane 0 is meaningful.
    out = jnp.dot(h, w_ref[NUM_LAYERS - 1],
                  preferred_element_type=jnp.float32) + b_ref[NUM_LAYERS - 1]
    o_ref[...] = out[:, :o_ref.shape[-1]]


def init_params(key, hidden_size=HIDDEN):
    """Deterministic init matching nn.Linear default: U(-1/sqrt(fan_in), +1/sqrt(fan_in)).

    Weights are stored transposed as (in_features, out_features) so the kernel
    computes act @ W directly.
    """
    dims = [(IN_DIM, hidden_size)] + [(hidden_size, hidden_size)] * 4 + [(hidden_size, OUT_DIM)]
    params = []
    for fan_in, fan_out in dims:
        key, kw, kb = jax.random.split(key, 3)
        bound = 1.0 / np.sqrt(fan_in)
        w = jax.random.uniform(kw, (fan_in, fan_out), jnp.float32, -bound, bound)
        b = jax.random.uniform(kb, (1, fan_out), jnp.float32, -bound, bound)
        params.append((w, b))
    return params


def pack_params(params):
    """Pad + pack all layer weights/biases ONCE (outside the per-call path)."""
    w_packed = np.zeros((NUM_LAYERS, LANE, LANE), np.float32)
    b_packed = np.zeros((NUM_LAYERS, 1, LANE), np.float32)
    for i, (w, b) in enumerate(params):
        fan_in, fan_out = w.shape
        w_packed[i, :fan_in, :fan_out] = np.asarray(w)
        b_packed[i, 0, :fan_out] = np.asarray(b).reshape(-1)
    return jnp.asarray(w_packed), jnp.asarray(b_packed)


@functools.partial(jax.jit, static_argnames=("block_rows",))
def mlp_forward(x, w_packed, b_packed, block_rows=DEFAULT_BLOCK_ROWS):
    """x: (B, 2) f32 -> (B, 1) f32."""
    B = x.shape[0]
    bp8 = _round_up(B, SUBLANE)
    tb = min(block_rows, bp8)          # batch tile (multiple of 8)
    Bp = _round_up(bp8, tb)

    x_p = jnp.pad(x.astype(jnp.float32), ((0, Bp - B), (0, 0)))   # (Bp, 2)

    out_p = pl.pallas_call(
        mlp_kernel,
        out_shape=jax.ShapeDtypeStruct((Bp, OUT_PAD), jnp.float32),
        grid=(Bp // tb,),
        in_specs=[
            # Batch-tiled input: only the real 8 bytes/row are DMA'd.
            pl.BlockSpec((tb, IN_DIM), lambda i: (i, 0)),
            # Packed weights / biases: constant block index -> VMEM-resident.
            pl.BlockSpec((NUM_LAYERS, LANE, LANE), lambda i: (0, 0, 0)),
            pl.BlockSpec((NUM_LAYERS, 1, LANE), lambda i: (0, 0, 0)),
        ],
        out_specs=pl.BlockSpec((tb, OUT_PAD), lambda i: (i, 0)),
        compiler_params=pltpu.CompilerParams(
            dimension_semantics=("parallel",)),
    )(x_p, w_packed, b_packed)

    return out_p[:B, :OUT_DIM]


def mlp_reference(x, params):
    h = x.astype(jnp.float32)
    for i, (w, b) in enumerate(params):
        h = h @ w + b
        if i < NUM_LAYERS - 1:
            h = jnp.maximum(h, 0.0)
    return h


if __name__ == "__main__":
    key = jax.random.PRNGKey(0)
    key, kx, ky = jax.random.split(key, 3)

    params = init_params(key, hidden_size=HIDDEN)
    w_packed, b_packed = pack_params(params)   # padded/packed ONCE, reused every call

    # forward() is called on cat((x, y), dim=1): build a (batch, 2) input.
    batch = 8
    x_vals = jax.random.normal(kx, (batch, 1), jnp.float32)
    y_vals = jax.random.normal(ky, (batch, 1), jnp.float32)
    inputs = jnp.concatenate([x_vals, y_vals], axis=1)   # (8, 2)

    out = jax.block_until_ready(mlp_forward(inputs, w_packed, b_packed))

    ref = mlp_reference(inputs, params)
    np.testing.assert_allclose(np.asarray(out), np.asarray(ref), rtol=1e-5, atol=1e-5)
    assert out.shape == (batch, OUT_DIM) and out.dtype == jnp.float32
    print("KERNEL_OK")
</pallas_src>

<mosaic_0001>
module attributes {stable_mosaic.version = 11 : i64} {
  func.func @mlp_kernel(%arg0: i32, %arg1: memref<8x2xf32, #tpu.memory_space<vmem>>, %arg2: memref<6x128x128xf32, #tpu.memory_space<vmem>>, %arg3: memref<6x1x128xf32, #tpu.memory_space<vmem>>, %arg4: memref<8x8xf32, #tpu.memory_space<vmem>>) attributes {dimension_semantics = [#tpu.dimension_semantics<parallel>], iteration_bounds = array<i64: 1>, scalar_prefetch = 0 : i64, scratch_operands = 0 : i64, tpu.core_type = #tpu.core_type<tc>, window_params = [{transform_indices = @transform_0, window_bounds = array<i64: 8, 2>}, {pipeline_mode = #tpu.pipeline_mode<synchronous>, transform_indices = @transform_1, window_bounds = array<i64: 6, 128, 128>}, {pipeline_mode = #tpu.pipeline_mode<synchronous>, transform_indices = @transform_2, window_bounds = array<i64: 6, 1, 128>}, {transform_indices = @transform_3, window_bounds = array<i64: 8, 8>}]} {
    %c0 = arith.constant 0 : index
    %c0_0 = arith.constant 0 : index
    %0 = vector.load %arg1[%c0, %c0_0] : memref<8x2xf32, #tpu.memory_space<vmem>>, vector<8x1xf32>
    %c0_1 = arith.constant 0 : index
    %c1 = arith.constant 1 : index
    %1 = vector.load %arg1[%c0_1, %c1] : memref<8x2xf32, #tpu.memory_space<vmem>>, vector<8x1xf32>
    %c0_2 = arith.constant 0 : index
    %c0_3 = arith.constant 0 : index
    %c0_4 = arith.constant 0 : index
    %2 = vector.load %arg2[%c0_2, %c0_3, %c0_4] : memref<6x128x128xf32, #tpu.memory_space<vmem>>, vector<1x128x128xf32>
    %3 = vector.shape_cast %2 : vector<1x128x128xf32> to vector<128x128xf32>
    %4 = vector.extract_strided_slice %3 {offsets = [0, 0], sizes = [1, 128], strides = [1, 1]} : vector<128x128xf32> to vector<1x128xf32>
    %5 = vector.broadcast %0 : vector<8x1xf32> to vector<8x128xf32>
    %6 = vector.broadcast %4 : vector<1x128xf32> to vector<8x128xf32>
    %7 = arith.mulf %5, %6 : vector<8x128xf32>
    %8 = vector.extract_strided_slice %3 {offsets = [1, 0], sizes = [1, 128], strides = [1, 1]} : vector<128x128xf32> to vector<1x128xf32>
    %9 = vector.broadcast %1 : vector<8x1xf32> to vector<8x128xf32>
    %10 = vector.broadcast %8 : vector<1x128xf32> to vector<8x128xf32>
    %11 = arith.mulf %9, %10 : vector<8x128xf32>
    %12 = arith.addf %7, %11 : vector<8x128xf32>
    %c0_5 = arith.constant 0 : index
    %c0_6 = arith.constant 0 : index
    %c0_7 = arith.constant 0 : index
    %13 = vector.load %arg3[%c0_5, %c0_6, %c0_7] : memref<6x1x128xf32, #tpu.memory_space<vmem>>, vector<1x1x128xf32>
    %14 = vector.shape_cast %13 : vector<1x1x128xf32> to vector<1x128xf32>
    %15 = vector.broadcast %14 : vector<1x128xf32> to vector<8x128xf32>
    %16 = arith.addf %12, %15 : vector<8x128xf32>
    %cst = arith.constant 0.000000e+00 : f32
    %17 = vector.broadcast %cst : f32 to vector<8x128xf32>
    %18 = arith.maximumf %16, %17 : vector<8x128xf32>
    %c1_8 = arith.constant 1 : index
    %c0_9 = arith.constant 0 : index
    %c0_10 = arith.constant 0 : index
    %19 = vector.load %arg2[%c1_8, %c0_9, %c0_10] : memref<6x128x128xf32, #tpu.memory_space<vmem>>, vector<1x128x128xf32>
    %20 = vector.shape_cast %19 : vector<1x128x128xf32> to vector<128x128xf32>
    %cst_11 = arith.constant dense<0.000000e+00> : vector<8x128xf32>
    %21 = tpu.matmul %18, %20, %cst_11 {dimension_numbers = #tpu.dot_dimension_numbers<[1], [0], [0], [1], [0, 0, 1, 1], [], []>} : vector<8x128xf32>, vector<128x128xf32>, vector<8x128xf32> -> vector<8x128xf32>
    %c1_12 = arith.constant 1 : index
    %c0_13 = arith.constant 0 : index
    %c0_14 = arith.constant 0 : index
    %22 = vector.load %arg3[%c1_12, %c0_13, %c0_14] : memref<6x1x128xf32, #tpu.memory_space<vmem>>, vector<1x1x128xf32>
    %23 = vector.shape_cast %22 : vector<1x1x128xf32> to vector<1x128xf32>
    %24 = vector.broadcast %23 : vector<1x128xf32> to vector<8x128xf32>
    %25 = arith.addf %21, %24 : vector<8x128xf32>
    %cst_15 = arith.constant 0.000000e+00 : f32
    %26 = vector.broadcast %cst_15 : f32 to vector<8x128xf32>
    %27 = arith.maximumf %25, %26 : vector<8x128xf32>
    %c2 = arith.constant 2 : index
    %c0_16 = arith.constant 0 : index
    %c0_17 = arith.constant 0 : index
    %28 = vector.load %arg2[%c2, %c0_16, %c0_17] : memref<6x128x128xf32, #tpu.memory_space<vmem>>, vector<1x128x128xf32>
    %29 = vector.shape_cast %28 : vector<1x128x128xf32> to vector<128x128xf32>
    %cst_18 = arith.constant dense<0.000000e+00> : vector<8x128xf32>
    %30 = tpu.matmul %27, %29, %cst_18 {dimension_numbers = #tpu.dot_dimension_numbers<[1], [0], [0], [1], [0, 0, 1, 1], [], []>} : vector<8x128xf32>, vector<128x128xf32>, vector<8x128xf32> -> vector<8x128xf32>
    %c2_19 = arith.constant 2 : index
    %c0_20 = arith.constant 0 : index
    %c0_21 = arith.constant 0 : index
    %31 = vector.load %arg3[%c2_19, %c0_20, %c0_21] : memref<6x1x128xf32, #tpu.memory_space<vmem>>, vector<1x1x128xf32>
    %32 = vector.shape_cast %31 : vector<1x1x128xf32> to vector<1x128xf32>
    %33 = vector.broadcast %32 : vector<1x128xf32> to vector<8x128xf32>
    %34 = arith.addf %30, %33 : vector<8x128xf32>
    %cst_22 = arith.constant 0.000000e+00 : f32
    %35 = vector.broadcast %cst_22 : f32 to vector<8x128xf32>
    %36 = arith.maximumf %34, %35 : vector<8x128xf32>
    %c3 = arith.constant 3 : index
    %c0_23 = arith.constant 0 : index
    %c0_24 = arith.constant 0 : index
    %37 = vector.load %arg2[%c3, %c0_23, %c0_24] : memref<6x128x128xf32, #tpu.memory_space<vmem>>, vector<1x128x128xf32>
    %38 = vector.shape_cast %37 : vector<1x128x128xf32> to vector<128x128xf32>
    %cst_25 = arith.constant dense<0.000000e+00> : vector<8x128xf32>
    %39 = tpu.matmul %36, %38, %cst_25 {dimension_numbers = #tpu.dot_dimension_numbers<[1], [0], [0], [1], [0, 0, 1, 1], [], []>} : vector<8x128xf32>, vector<128x128xf32>, vector<8x128xf32> -> vector<8x128xf32>
    %c3_26 = arith.constant 3 : index
    %c0_27 = arith.constant 0 : index
    %c0_28 = arith.constant 0 : index
    %40 = vector.load %arg3[%c3_26, %c0_27, %c0_28] : memref<6x1x128xf32, #tpu.memory_space<vmem>>, vector<1x1x128xf32>
    %41 = vector.shape_cast %40 : vector<1x1x128xf32> to vector<1x128xf32>
    %42 = vector.broadcast %41 : vector<1x128xf32> to vector<8x128xf32>
    %43 = arith.addf %39, %42 : vector<8x128xf32>
    %cst_29 = arith.constant 0.000000e+00 : f32
    %44 = vector.broadcast %cst_29 : f32 to vector<8x128xf32>
    %45 = arith.maximumf %43, %44 : vector<8x128xf32>
    %c4 = arith.constant 4 : index
    %c0_30 = arith.constant 0 : index
    %c0_31 = arith.constant 0 : index
    %46 = vector.load %arg2[%c4, %c0_30, %c0_31] : memref<6x128x128xf32, #tpu.memory_space<vmem>>, vector<1x128x128xf32>
    %47 = vector.shape_cast %46 : vector<1x128x128xf32> to vector<128x128xf32>
    %cst_32 = arith.constant dense<0.000000e+00> : vector<8x128xf32>
    %48 = tpu.matmul %45, %47, %cst_32 {dimension_numbers = #tpu.dot_dimension_numbers<[1], [0], [0], [1], [0, 0, 1, 1], [], []>} : vector<8x128xf32>, vector<128x128xf32>, vector<8x128xf32> -> vector<8x128xf32>
    %c4_33 = arith.constant 4 : index
    %c0_34 = arith.constant 0 : index
    %c0_35 = arith.constant 0 : index
    %49 = vector.load %arg3[%c4_33, %c0_34, %c0_35] : memref<6x1x128xf32, #tpu.memory_space<vmem>>, vector<1x1x128xf32>
    %50 = vector.shape_cast %49 : vector<1x1x128xf32> to vector<1x128xf32>
    %51 = vector.broadcast %50 : vector<1x128xf32> to vector<8x128xf32>
    %52 = arith.addf %48, %51 : vector<8x128xf32>
    %cst_36 = arith.constant 0.000000e+00 : f32
    %53 = vector.broadcast %cst_36 : f32 to vector<8x128xf32>
    %54 = arith.maximumf %52, %53 : vector<8x128xf32>
    %c5 = arith.constant 5 : index
    %c0_37 = arith.constant 0 : index
    %c0_38 = arith.constant 0 : index
    %55 = vector.load %arg2[%c5, %c0_37, %c0_38] : memref<6x128x128xf32, #tpu.memory_space<vmem>>, vector<1x128x128xf32>
    %56 = vector.shape_cast %55 : vector<1x128x128xf32> to vector<128x128xf32>
    %cst_39 = arith.constant dense<0.000000e+00> : vector<8x128xf32>
    %57 = tpu.matmul %54, %56, %cst_39 {dimension_numbers = #tpu.dot_dimension_numbers<[1], [0], [0], [1], [0, 0, 1, 1], [], []>} : vector<8x128xf32>, vector<128x128xf32>, vector<8x128xf32> -> vector<8x128xf32>
    %c5_40 = arith.constant 5 : index
    %c0_41 = arith.constant 0 : index
    %c0_42 = arith.constant 0 : index
    %58 = vector.load %arg3[%c5_40, %c0_41, %c0_42] : memref<6x1x128xf32, #tpu.memory_space<vmem>>, vector<1x1x128xf32>
    %59 = vector.shape_cast %58 : vector<1x1x128xf32> to vector<1x128xf32>
    %60 = vector.broadcast %59 : vector<1x128xf32> to vector<8x128xf32>
    %61 = arith.addf %57, %60 : vector<8x128xf32>
    %62 = vector.extract_strided_slice %61 {offsets = [0, 0], sizes = [8, 8], strides = [1, 1]} : vector<8x128xf32> to vector<8x8xf32>
    %c0_43 = arith.constant 0 : index
    %c0_44 = arith.constant 0 : index
    %63 = vector.load %arg4[%c0_43, %c0_44] : memref<8x8xf32, #tpu.memory_space<vmem>>, vector<8x8xf32>
    tpu.vector_store %arg4[%c0_43, %c0_44], %62 {strides = array<i32>} : memref<8x8xf32, #tpu.memory_space<vmem>>, vector<8x8xf32>,
    return
  }
  func.func @transform_0(%arg0: i32) -> (i32, i32) {
    %c0_i32 = arith.constant 0 : i32
    %c0_i32_0 = arith.constant 0 : i32
    return %arg0, %c0_i32 : i32, i32
  }
  func.func @transform_1(%arg0: i32) -> (i32, i32, i32) {
    %c0_i32 = arith.constant 0 : i32
    %c0_i32_0 = arith.constant 0 : i32
    %c0_i32_1 = arith.constant 0 : i32
    %c0_i32_2 = arith.constant 0 : i32
    return %c0_i32, %c0_i32_0, %c0_i32_1 : i32, i32, i32
  }
  func.func @transform_2(%arg0: i32) -> (i32, i32, i32) {
    %c0_i32 = arith.constant 0 : i32
    %c0_i32_0 = arith.constant 0 : i32
    %c0_i32_1 = arith.constant 0 : i32
    %c0_i32_2 = arith.constant 0 : i32
    return %c0_i32, %c0_i32_0, %c0_i32_1 : i32, i32, i32
  }
  func.func @transform_3(%arg0: i32) -> (i32, i32) {
    %c0_i32 = arith.constant 0 : i32
    %c0_i32_0 = arith.constant 0 : i32
    return %arg0, %c0_i32 : i32, i32
  }
}

</mosaic_0001>

<llo_original>
// kernel: mlp_forward.1
$region0: #{mlp_forward.1}
  #allocation0 [shape = 'u32[]', space=smem, size = 0x4, offset = 0x4, fixed_abs, tag = 'smem constant byte address 0x4 - core index']
  #allocation1 [shape = 'u32[144,128]{1,0:T(1,128)}', space=vmem, size = 0x12000, scoped, tag = 'internal scratch']
  %s0 = inlined_call_operand.vmem [shape: f32[8,2], index: 0, kind: input, shape index: {}]
  %s1 = inlined_call_operand.hbm [shape: f32[6,128,128], index: 1, kind: input, shape index: {}]
  %s2 = inlined_call_operand.vmem [shape: f32[6,1,128], index: 2, kind: input, shape index: {}]
  %s3 = inlined_call_operand.vmem [shape: f32[8,8], index: 3, kind: output, shape index: {}]
  %s4 = sld [smem:[#allocation0]]
  $region26: #{mlp_forward.1} parent=0
    _
  %s6 = ssub.s32 1, %s4
  %s7 = scalar_select 0, %s6, %s4
  $region1: #{mlp_forward.1} parent=0
    #allocation2 [shape = 'u8[393216]{0}', space=vmem, size = 0x60000, scoped, tag = 'input window, operand 1, single buffered']
    #allocation3 [shape = 's32[1]{0}', space=sflag, size = 0x4, scoped, tag = 'scoped memory for mlp_forward.1']
    %8 = vsyncpa [#allocation3], 0
    // Predicated region
    $region2: #{mlp_forward.1} parent=1 // pred_check
      _
    $region3: #{mlp_forward.1} parent=1 // pred_check_branch
      %10 = sbr.rel (0) target = $region5
    $region4: #{mlp_forward.1} parent=1 // pred_region
      _
    $region5: #{mlp_forward.1} parent=1 // pred_fallthru
      _
    // Predicated region
    $region6: #{mlp_forward.1} parent=1 // pred_check
      _
    $region7: #{mlp_forward.1} parent=1 // pred_check_branch
      %12 = sbr.rel (0) target = $region9
    $region8: #{mlp_forward.1} parent=1 // pred_region
      %s14 = ssub.s32 12288, 12288
      %15 = vsyncadd [#allocation3], %s14
      %s16 = sshll.u32 [#allocation2], 4
      %s17 = int_to_ptr.vmem [resolvable:$true] %s16
      %22 = dma.hbm_to_vmem [thread:$0]  %s1, 12288, %s17, [#allocation3], 128, 128, 8
    $region9: #{mlp_forward.1} parent=1 // pred_fallthru
      _
    // Predicated region
    $region10: #{mlp_forward.1} parent=1 // pred_check
      _
    $region11: #{mlp_forward.1} parent=1 // pred_check_branch
      %24 = sbr.rel (0) target = $region13
    $region12: #{mlp_forward.1} parent=1 // pred_region
      _
    $region13: #{mlp_forward.1} parent=1 // pred_fallthru
      _
    // Predicated region
    $region14: #{mlp_forward.1} parent=1 // pred_check
      _
    $region15: #{mlp_forward.1} parent=1 // pred_check_branch
      %26 = sbr.rel (0) target = $region17
    $region16: #{mlp_forward.1} parent=1 // pred_region
      %27 = dma.done [#allocation3], 12288
    $region17: #{mlp_forward.1} parent=1 // pred_fallthru
      _
    %v28 = vld [vmem:[%s0] sm:$0xff]
    %v29 = vld [vmem:[#allocation2] sm:$0xff]
    %31 = vset.pattern.permute.xlu0 0
    %32 = vperm.xlu0 %31, %v28
    %v33 = vpop.permute.xlu0 %32
    %v35 = vlaneseq
    %v36 = vshrl.u32 %v35, 7
    %v37 = vsub.s32 0, %v36
    %v38 = vrot.slane %v29, %v37
    %v39 = vmul.f32 %v33, %v38
    %40 = vset.pattern.permute.xlu0 1
    %41 = vperm.xlu0 %40, %v28
    %v42 = vpop.permute.xlu0 %41
    %v44 = vlaneseq
    %v45 = vshrl.u32 %v44, 7
    %v46 = vsub.s32 1, %v45
    %v47 = vrot.slane %v29, %v46
    %v48 = vmul.f32 %v42, %v47
    %v49 = vadd.f32 %v39, %v48
    %v50 = vld [vmem:[%s2] sm:$0x1]
    %v52 = vlaneseq
    %v53 = vshrl.u32 %v52, 7
    %v54 = vsub.s32 0, %v53
    %v55 = vrot.slane %v50, %v54
    %v57 = vadd.f32 %v49, %v55
    %v58 = vmax.f32 %v57, 0.0
    %s59 = scalar_lea.vmem [#allocation2], 128
    %v60 = vld [vmem:[%s59] sm:$0xff]
    %v61 = vld [vmem:[%s59 + $0x8] sm:$0xff]
    %v62 = vld [vmem:[%s59 + $0x10] sm:$0xff]
    %v63 = vld [vmem:[%s59 + $0x18] sm:$0xff]
    %v64 = vld [vmem:[%s59 + $0x20] sm:$0xff]
    %v65 = vld [vmem:[%s59 + $0x28] sm:$0xff]
    %v66 = vld [vmem:[%s59 + $0x30] sm:$0xff]
    %v67 = vld [vmem:[%s59 + $0x38] sm:$0xff]
    %v68 = vld [vmem:[%s59 + $0x40] sm:$0xff]
    %v69 = vld [vmem:[%s59 + $0x48] sm:$0xff]
    %v70 = vld [vmem:[%s59 + $0x50] sm:$0xff]
    %v71 = vld [vmem:[%s59 + $0x58] sm:$0xff]
    %v72 = vld [vmem:[%s59 + $0x60] sm:$0xff]
    %v73 = vld [vmem:[%s59 + $0x68] sm:$0xff]
    %v74 = vld [vmem:[%s59 + $0x70] sm:$0xff]
    %v75 = vld [vmem:[%s59 + $0x78] sm:$0xff]
    %s76 = scalar_lea.vmem %s2, 1
    %v77 = vld [vmem:[%s76] sm:$0x1]
    %v79 = vlaneseq
    %v80 = vshrl.u32 %v79, 7
    %v81 = vsub.s32 0, %v80
    %v82 = vrot.slane %v77, %v81
    %84 = vmatprep.subr.mxu0 0.0
    %85 = vmatpush1.msra.mxu0 %v60
    %86 = vmatprep.subr.mxu0 0.0
    %87 = vmatpush1.msra.mxu0 %v61
    %88 = vmatprep.subr.mxu0 0.0
    %89 = vmatpush1.msra.mxu0 %v62
    %90 = vmatprep.subr.mxu0 0.0
    %91 = vmatpush1.msra.mxu0 %v63
    %92 = vmatprep.subr.mxu0 0.0
    %93 = vmatpush1.msra.mxu0 %v64
    %94 = vmatprep.subr.mxu0 0.0
    %95 = vmatpush1.msra.mxu0 %v65
    %96 = vmatprep.subr.mxu0 0.0
    %97 = vmatpush1.msra.mxu0 %v66
    %98 = vmatprep.subr.mxu0 0.0
    %99 = vmatpush1.msra.mxu0 %v67
    %100 = vmatprep.subr.mxu0 0.0
    %101 = vmatpush1.msra.mxu0 %v68
    %102 = vmatprep.subr.mxu0 0.0
    %103 = vmatpush1.msra.mxu0 %v69
    %104 = vmatprep.subr.mxu0 0.0
    %105 = vmatpush1.msra.mxu0 %v70
    %106 = vmatprep.subr.mxu0 0.0
    %107 = vmatpush1.msra.mxu0 %v71
    %108 = vmatprep.subr.mxu0 0.0
    %109 = vmatpush1.msra.mxu0 %v72
    %110 = vmatprep.subr.mxu0 0.0
    %111 = vmatpush1.msra.mxu0 %v73
    %112 = vmatprep.subr.mxu0 0.0
    %113 = vmatpush1.msra.mxu0 %v74
    %114 = vmatprep.subr.mxu0 0.0
    %115 = vmatpush1.msra.mxu0 %v75
    %116 = vmatprep.subr.mxu0 0.0
    %117 = vmatpush1.msra.mxu0 0.0
    %118 = vmatprep.subr.mxu0 0.0
    %119 = vmatpush1.msra.mxu0 0.0
    %120 = vmatprep.subr.mxu0 0.0
    %121 = vmatpush1.msra.mxu0 0.0
    %122 = vmatprep.subr.mxu0 0.0
    %123 = vmatpush1.msra.mxu0 0.0
    %124 = vmatprep.subr.mxu0 0.0
    %125 = vmatpush1.msra.mxu0 0.0
    %126 = vmatprep.subr.mxu0 0.0
    %127 = vmatpush1.msra.mxu0 0.0
    %128 = vmatprep.subr.mxu0 0.0
    %129 = vmatpush1.msra.mxu0 0.0
    %130 = vmatprep.subr.mxu0 0.0
    %131 = vmatpush1.msra.mxu0 0.0
    %132 = vmatprep.subr.mxu0 0.0
    %133 = vmatpush1.msra.mxu0 0.0
    %134 = vmatprep.subr.mxu0 0.0
    %135 = vmatpush1.msra.mxu0 0.0
    %136 = vmatprep.subr.mxu0 0.0
    %137 = vmatpush1.msra.mxu0 0.0
    %138 = vmatprep.subr.mxu0 0.0
    %139 = vmatpush1.msra.mxu0 0.0
    %140 = vmatprep.subr.mxu0 0.0
    %141 = vmatpush1.msra.mxu0 0.0
    %142 = vmatprep.subr.mxu0 0.0
    %143 = vmatpush1.msra.mxu0 0.0
    %144 = vmatprep.subr.mxu0 0.0
    %145 = vmatpush1.msra.mxu0 0.0
    %146 = vmatprep.subr.mxu0 0.0
    %147 = vmatpush1.msra.mxu0 0.0
    %148 = vmatprep.mubr.f32.mxu0 0.0
    %149 = vmatmul.mubr.f32.gmra.mrb[0].mxu0 %v58
    %v150 = vpop.f32.mrb[0].mxu0
    %v151 = vadd.f32 %v82, %v150
    %v152 = vpop.f32.mrb[0].mxu0
    %153 = vdwg.mxu0
    %v154 = vmax.f32 %v151, 0.0
    %s155 = scalar_lea.vmem [#allocation2], 256
    %v156 = vld [vmem:[%s155] sm:$0xff]
    %v157 = vld [vmem:[%s155 + $0x8] sm:$0xff]
    %v158 = vld [vmem:[%s155 + $0x10] sm:$0xff]
    %v159 = vld [vmem:[%s155 + $0x18] sm:$0xff]
    %v160 = vld [vmem:[%s155 + $0x20] sm:$0xff]
    %v161 = vld [vmem:[%s155 + $0x28] sm:$0xff]
    %v162 = vld [vmem:[%s155 + $0x30] sm:$0xff]
    %v163 = vld [vmem:[%s155 + $0x38] sm:$0xff]
    %v164 = vld [vmem:[%s155 + $0x40] sm:$0xff]
    %v165 = vld [vmem:[%s155 + $0x48] sm:$0xff]
    %v166 = vld [vmem:[%s155 + $0x50] sm:$0xff]
    %v167 = vld [vmem:[%s155 + $0x58] sm:$0xff]
    %v168 = vld [vmem:[%s155 + $0x60] sm:$0xff]
    %v169 = vld [vmem:[%s155 + $0x68] sm:$0xff]
    %v170 = vld [vmem:[%s155 + $0x70] sm:$0xff]
    %v171 = vld [vmem:[%s155 + $0x78] sm:$0xff]
    %s172 = scalar_lea.vmem %s2, 2
    %v173 = vld [vmem:[%s172] sm:$0x1]
    %v175 = vlaneseq
    %v176 = vshrl.u32 %v175, 7
    %v177 = vsub.s32 0, %v176
    %v178 = vrot.slane %v173, %v177
    %180 = vmatprep.subr.mxu0 0.0
    %181 = vmatpush1.msra.mxu0 %v156
    %182 = vmatprep.subr.mxu0 0.0
    %183 = vmatpush1.msra.mxu0 %v157
    %184 = vmatprep.subr.mxu0 0.0
    %185 = vmatpush1.msra.mxu0 %v158
    %186 = vmatprep.subr.mxu0 0.0
    %187 = vmatpush1.msra.mxu0 %v159
    %188 = vmatprep.subr.mxu0 0.0
    %189 = vmatpush1.msra.mxu0 %v160
    %190 = vmatprep.subr.mxu0 0.0
    %191 = vmatpush1.msra.mxu0 %v161
    %192 = vmatprep.subr.mxu0 0.0
    %193 = vmatpush1.msra.mxu0 %v162
    %194 = vmatprep.subr.mxu0 0.0
    %195 = vmatpush1.msra.mxu0 %v163
    %196 = vmatprep.subr.mxu0 0.0
    %197 = vmatpush1.msra.mxu0 %v164
    %198 = vmatprep.subr.mxu0 0.0
    %199 = vmatpush1.msra.mxu0 %v165
    %200 = vmatprep.subr.mxu0 0.0
    %201 = vmatpush1.msra.mxu0 %v166
    %202 = vmatprep.subr.mxu0 0.0
    %203 = vmatpush1.msra.mxu0 %v167
    %204 = vmatprep.subr.mxu0 0.0
    %205 = vmatpush1.msra.mxu0 %v168
    %206 = vmatprep.subr.mxu0 0.0
    %207 = vmatpush1.msra.mxu0 %v169
    %208 = vmatprep.subr.mxu0 0.0
    %209 = vmatpush1.msra.mxu0 %v170
    %210 = vmatprep.subr.mxu0 0.0
    %211 = vmatpush1.msra.mxu0 %v171
    %212 = vmatprep.subr.mxu0 0.0
    %213 = vmatpush1.msra.mxu0 0.0
    %214 = vmatprep.subr.mxu0 0.0
    %215 = vmatpush1.msra.mxu0 0.0
    %216 = vmatprep.subr.mxu0 0.0
    %217 = vmatpush1.msra.mxu0 0.0
    %218 = vmatprep.subr.mxu0 0.0
    %219 = vmatpush1.msra.mxu0 0.0
    %220 = vmatprep.subr.mxu0 0.0
    %221 = vmatpush1.msra.mxu0 0.0
    %222 = vmatprep.subr.mxu0 0.0
    %223 = vmatpush1.msra.mxu0 0.0
    %224 = vmatprep.subr.mxu0 0.0
    %225 = vmatpush1.msra.mxu0 0.0
    %226 = vmatprep.subr.mxu0 0.0
    %227 = vmatpush1.msra.mxu0 0.0
    %228 = vmatprep.subr.mxu0 0.0
    %229 = vmatpush1.msra.mxu0 0.0
    %230 = vmatprep.subr.mxu0 0.0
    %231 = vmatpush1.msra.mxu0 0.0
    %232 = vmatprep.subr.mxu0 0.0
    %233 = vmatpush1.msra.mxu0 0.0
    %234 = vmatprep.subr.mxu0 0.0
    %235 = vmatpush1.msra.mxu0 0.0
    %236 = vmatprep.subr.mxu0 0.0
    %237 = vmatpush1.msra.mxu0 0.0
    %238 = vmatprep.subr.mxu0 0.0
    %239 = vmatpush1.msra.mxu0 0.0
    %240 = vmatprep.subr.mxu0 0.0
    %241 = vmatpush1.msra.mxu0 0.0
    %242 = vmatprep.subr.mxu0 0.0
    %243 = vmatpush1.msra.mxu0 0.0
    %244 = vmatprep.mubr.f32.mxu0 0.0
    %245 = vmatmul.mubr.f32.gmra.mrb[0].mxu0 %v154
    %v246 = vpop.f32.mrb[0].mxu0
    %v247 = vadd.f32 %v178, %v246
    %v248 = vpop.f32.mrb[0].mxu0
    %249 = vdwg.mxu0
    %v250 = vmax.f32 %v247, 0.0
    %s251 = scalar_lea.vmem [#allocation2], 384
    %v252 = vld [vmem:[%s251] sm:$0xff]
    %v253 = vld [vmem:[%s251 + $0x8] sm:$0xff]
    %v254 = vld [vmem:[%s251 + $0x10] sm:$0xff]
    %v255 = vld [vmem:[%s251 + $0x18] sm:$0xff]
    %v256 = vld [vmem:[%s251 + $0x20] sm:$0xff]
    %v257 = vld [vmem:[%s251 + $0x28] sm:$0xff]
    %v258 = vld [vmem:[%s251 + $0x30] sm:$0xff]
    %v259 = vld [vmem:[%s251 + $0x38] sm:$0xff]
    %v260 = vld [vmem:[%s251 + $0x40] sm:$0xff]
    %v261 = vld [vmem:[%s251 + $0x48] sm:$0xff]
    %v262 = vld [vmem:[%s251 + $0x50] sm:$0xff]
    %v263 = vld [vmem:[%s251 + $0x58] sm:$0xff]
    %v264 = vld [vmem:[%s251 + $0x60] sm:$0xff]
    %v265 = vld [vmem:[%s251 + $0x68] sm:$0xff]
    %v266 = vld [vmem:[%s251 + $0x70] sm:$0xff]
    %v267 = vld [vmem:[%s251 + $0x78] sm:$0xff]
    %s268 = scalar_lea.vmem %s2, 3
    %v269 = vld [vmem:[%s268] sm:$0x1]
    %v271 = vlaneseq
    %v272 = vshrl.u32 %v271, 7
    %v273 = vsub.s32 0, %v272
    %v274 = vrot.slane %v269, %v273
    %276 = vmatprep.subr.mxu0 0.0
    %277 = vmatpush1.msra.mxu0 %v252
    %278 = vmatprep.subr.mxu0 0.0
    %279 = vmatpush1.msra.mxu0 %v253
    %280 = vmatprep.subr.mxu0 0.0
    %281 = vmatpush1.msra.mxu0 %v254
    %282 = vmatprep.subr.mxu0 0.0
    %283 = vmatpush1.msra.mxu0 %v255
    %284 = vmatprep.subr.mxu0 0.0
    %285 = vmatpush1.msra.mxu0 %v256
    %286 = vmatprep.subr.mxu0 0.0
    %287 = vmatpush1.msra.mxu0 %v257
    %288 = vmatprep.subr.mxu0 0.0
    %289 = vmatpush1.msra.mxu0 %v258
    %290 = vmatprep.subr.mxu0 0.0
    %291 = vmatpush1.msra.mxu0 %v259
    %292 = vmatprep.subr.mxu0 0.0
    %293 = vmatpush1.msra.mxu0 %v260
    %294 = vmatprep.subr.mxu0 0.0
    %295 = vmatpush1.msra.mxu0 %v261
    %296 = vmatprep.subr.mxu0 0.0
    %297 = vmatpush1.msra.mxu0 %v262
    %298 = vmatprep.subr.mxu0 0.0
    %299 = vmatpush1.msra.mxu0 %v263
    %300 = vmatprep.subr.mxu0 0.0
    %301 = vmatpush1.msra.mxu0 %v264
    %302 = vmatprep.subr.mxu0 0.0
    %303 = vmatpush1.msra.mxu0 %v265
    %304 = vmatprep.subr.mxu0 0.0
    %305 = vmatpush1.msra.mxu0 %v266
    %306 = vmatprep.subr.mxu0 0.0
    %307 = vmatpush1.msra.mxu0 %v267
    %308 = vmatprep.subr.mxu0 0.0
    %309 = vmatpush1.msra.mxu0 0.0
    %310 = vmatprep.subr.mxu0 0.0
    %311 = vmatpush1.msra.mxu0 0.0
    %312 = vmatprep.subr.mxu0 0.0
    %313 = vmatpush1.msra.mxu0 0.0
    %314 = vmatprep.subr.mxu0 0.0
    %315 = vmatpush1.msra.mxu0 0.0
    %316 = vmatprep.subr.mxu0 0.0
    %317 = vmatpush1.msra.mxu0 0.0
    %318 = vmatprep.subr.mxu0 0.0
    %319 = vmatpush1.msra.mxu0 0.0
    %320 = vmatprep.subr.mxu0 0.0
    %321 = vmatpush1.msra.mxu0 0.0
    %322 = vmatprep.subr.mxu0 0.0
    %323 = vmatpush1.msra.mxu0 0.0
    %324 = vmatprep.subr.mxu0 0.0
    %325 = vmatpush1.msra.mxu0 0.0
    %326 = vmatprep.subr.mxu0 0.0
    %327 = vmatpush1.msra.mxu0 0.0
    %328 = vmatprep.subr.mxu0 0.0
    %329 = vmatpush1.msra.mxu0 0.0
    %330 = vmatprep.subr.mxu0 0.0
    %331 = vmatpush1.msra.mxu0 0.0
    %332 = vmatprep.subr.mxu0 0.0
    %333 = vmatpush1.msra.mxu0 0.0
    %334 = vmatprep.subr.mxu0 0.0
    %335 = vmatpush1.msra.mxu0 0.0
    %336 = vmatprep.subr.mxu0 0.0
    %337 = vmatpush1.msra.mxu0 0.0
    %338 = vmatprep.subr.mxu0 0.0
    %339 = vmatpush1.msra.mxu0 0.0
    %340 = vmatprep.mubr.f32.mxu0 0.0
    %341 = vmatmul.mubr.f32.gmra.mrb[0].mxu0 %v250
    %v342 = vpop.f32.mrb[0].mxu0
    %v343 = vadd.f32 %v274, %v342
    %v344 = vpop.f32.mrb[0].mxu0
    %345 = vdwg.mxu0
    %v346 = vmax.f32 %v343, 0.0
    %s347 = scalar_lea.vmem [#allocation2], 512
    %v348 = vld [vmem:[%s347] sm:$0xff]
    %v349 = vld [vmem:[%s347 + $0x8] sm:$0xff]
    %v350 = vld [vmem:[%s347 + $0x10] sm:$0xff]
    %v351 = vld [vmem:[%s347 + $0x18] sm:$0xff]
    %v352 = vld [vmem:[%s347 + $0x20] sm:$0xff]
    %v353 = vld [vmem:[%s347 + $0x28] sm:$0xff]
    %v354 = vld [vmem:[%s347 + $0x30] sm:$0xff]
    %v355 = vld [vmem:[%s347 + $0x38] sm:$0xff]
    %v356 = vld [vmem:[%s347 + $0x40] sm:$0xff]
    %v357 = vld [vmem:[%s347 + $0x48] sm:$0xff]
    %v358 = vld [vmem:[%s347 + $0x50] sm:$0xff]
    %v359 = vld [vmem:[%s347 + $0x58] sm:$0xff]
    %v360 = vld [vmem:[%s347 + $0x60] sm:$0xff]
    %v361 = vld [vmem:[%s347 + $0x68] sm:$0xff]
    %v362 = vld [vmem:[%s347 + $0x70] sm:$0xff]
    %v363 = vld [vmem:[%s347 + $0x78] sm:$0xff]
    %s364 = scalar_lea.vmem %s2, 4
    %v365 = vld [vmem:[%s364] sm:$0x1]
    %v367 = vlaneseq
    %v368 = vshrl.u32 %v367, 7
    %v369 = vsub.s32 0, %v368
    %v370 = vrot.slane %v365, %v369
    %372 = vmatprep.subr.mxu0 0.0
    %373 = vmatpush1.msra.mxu0 %v348
    %374 = vmatprep.subr.mxu0 0.0
    %375 = vmatpush1.msra.mxu0 %v349
    %376 = vmatprep.subr.mxu0 0.0
    %377 = vmatpush1.msra.mxu0 %v350
    %378 = vmatprep.subr.mxu0 0.0
    %379 = vmatpush1.msra.mxu0 %v351
    %380 = vmatprep.subr.mxu0 0.0
    %381 = vmatpush1.msra.mxu0 %v352
    %382 = vmatprep.subr.mxu0 0.0
    %383 = vmatpush1.msra.mxu0 %v353
    %384 = vmatprep.subr.mxu0 0.0
    %385 = vmatpush1.msra.mxu0 %v354
    %386 = vmatprep.subr.mxu0 0.0
    %387 = vmatpush1.msra.mxu0 %v355
    %388 = vmatprep.subr.mxu0 0.0
    %389 = vmatpush1.msra.mxu0 %v356
    %390 = vmatprep.subr.mxu0 0.0
    %391 = vmatpush1.msra.mxu0 %v357
    %392 = vmatprep.subr.mxu0 0.0
    %393 = vmatpush1.msra.mxu0 %v358
    %394 = vmatprep.subr.mxu0 0.0
    %395 = vmatpush1.msra.mxu0 %v359
    %396 = vmatprep.subr.mxu0 0.0
    %397 = vmatpush1.msra.mxu0 %v360
    %398 = vmatprep.subr.mxu0 0.0
    %399 = vmatpush1.msra.mxu0 %v361
    %400 = vmatprep.subr.mxu0 0.0
    %401 = vmatpush1.msra.mxu0 %v362
    %402 = vmatprep.subr.mxu0 0.0
    %403 = vmatpush1.msra.mxu0 %v363
    %404 = vmatprep.subr.mxu0 0.0
    %405 = vmatpush1.msra.mxu0 0.0
    %406 = vmatprep.subr.mxu0 0.0
    %407 = vmatpush1.msra.mxu0 0.0
    %408 = vmatprep.subr.mxu0 0.0
    %409 = vmatpush1.msra.mxu0 0.0
    %410 = vmatprep.subr.mxu0 0.0
    %411 = vmatpush1.msra.mxu0 0.0
    %412 = vmatprep.subr.mxu0 0.0
    %413 = vmatpush1.msra.mxu0 0.0
    %414 = vmatprep.subr.mxu0 0.0
    %415 = vmatpush1.msra.mxu0 0.0
    %416 = vmatprep.subr.mxu0 0.0
    %417 = vmatpush1.msra.mxu0 0.0
    %418 = vmatprep.subr.mxu0 0.0
    %419 = vmatpush1.msra.mxu0 0.0
    %420 = vmatprep.subr.mxu0 0.0
    %421 = vmatpush1.msra.mxu0 0.0
    %422 = vmatprep.subr.mxu0 0.0
    %423 = vmatpush1.msra.mxu0 0.0
    %424 = vmatprep.subr.mxu0 0.0
    %425 = vmatpush1.msra.mxu0 0.0
    %426 = vmatprep.subr.mxu0 0.0
    %427 = vmatpush1.msra.mxu0 0.0
    %428 = vmatprep.subr.mxu0 0.0
    %429 = vmatpush1.msra.mxu0 0.0
    %430 = vmatprep.subr.mxu0 0.0
    %431 = vmatpush1.msra.mxu0 0.0
    %432 = vmatprep.subr.mxu0 0.0
    %433 = vmatpush1.msra.mxu0 0.0
    %434 = vmatprep.subr.mxu0 0.0
    %435 = vmatpush1.msra.mxu0 0.0
    %436 = vmatprep.mubr.f32.mxu0 0.0
    %437 = vmatmul.mubr.f32.gmra.mrb[0].mxu0 %v346
    %v438 = vpop.f32.mrb[0].mxu0
    %v439 = vadd.f32 %v370, %v438
    %v440 = vpop.f32.mrb[0].mxu0
    %441 = vdwg.mxu0
    %v442 = vmax.f32 %v439, 0.0
    %s443 = scalar_lea.vmem [#allocation2], 640
    %v444 = vld [vmem:[%s443] sm:$0xff]
    %v445 = vld [vmem:[%s443 + $0x8] sm:$0xff]
    %v446 = vld [vmem:[%s443 + $0x10] sm:$0xff]
    %v447 = vld [vmem:[%s443 + $0x18] sm:$0xff]
    %v448 = vld [vmem:[%s443 + $0x20] sm:$0xff]
    %v449 = vld [vmem:[%s443 + $0x28] sm:$0xff]
    %v450 = vld [vmem:[%s443 + $0x30] sm:$0xff]
    %v451 = vld [vmem:[%s443 + $0x38] sm:$0xff]
    %v452 = vld [vmem:[%s443 + $0x40] sm:$0xff]
    %v453 = vld [vmem:[%s443 + $0x48] sm:$0xff]
    %v454 = vld [vmem:[%s443 + $0x50] sm:$0xff]
    %v455 = vld [vmem:[%s443 + $0x58] sm:$0xff]
    %v456 = vld [vmem:[%s443 + $0x60] sm:$0xff]
    %v457 = vld [vmem:[%s443 + $0x68] sm:$0xff]
    %v458 = vld [vmem:[%s443 + $0x70] sm:$0xff]
    %v459 = vld [vmem:[%s443 + $0x78] sm:$0xff]
    %s460 = scalar_lea.vmem %s2, 5
    %v461 = vld [vmem:[%s460] sm:$0x1]
    %v463 = vlaneseq
    %v464 = vshrl.u32 %v463, 7
    %v465 = vsub.s32 0, %v464
    %v466 = vrot.slane %v461, %v465
    %468 = vmatprep.subr.mxu0 0.0
    %469 = vmatpush1.msra.mxu0 %v444
    %470 = vmatprep.subr.mxu0 0.0
    %471 = vmatpush1.msra.mxu0 %v445
    %472 = vmatprep.subr.mxu0 0.0
    %473 = vmatpush1.msra.mxu0 %v446
    %474 = vmatprep.subr.mxu0 0.0
    %475 = vmatpush1.msra.mxu0 %v447
    %476 = vmatprep.subr.mxu0 0.0
    %477 = vmatpush1.msra.mxu0 %v448
    %478 = vmatprep.subr.mxu0 0.0
    %479 = vmatpush1.msra.mxu0 %v449
    %480 = vmatprep.subr.mxu0 0.0
    %481 = vmatpush1.msra.mxu0 %v450
    %482 = vmatprep.subr.mxu0 0.0
    %483 = vmatpush1.msra.mxu0 %v451
    %484 = vmatprep.subr.mxu0 0.0
    %485 = vmatpush1.msra.mxu0 %v452
    %486 = vmatprep.subr.mxu0 0.0
    %487 = vmatpush1.msra.mxu0 %v453
    %488 = vmatprep.subr.mxu0 0.0
    %489 = vmatpush1.msra.mxu0 %v454
    %490 = vmatprep.subr.mxu0 0.0
    %491 = vmatpush1.msra.mxu0 %v455
    %492 = vmatprep.subr.mxu0 0.0
    %493 = vmatpush1.msra.mxu0 %v456
    %494 = vmatprep.subr.mxu0 0.0
    %495 = vmatpush1.msra.mxu0 %v457
    %496 = vmatprep.subr.mxu0 0.0
    %497 = vmatpush1.msra.mxu0 %v458
    %498 = vmatprep.subr.mxu0 0.0
    %499 = vmatpush1.msra.mxu0 %v459
    %500 = vmatprep.subr.mxu0 0.0
    %501 = vmatpush1.msra.mxu0 0.0
    %502 = vmatprep.subr.mxu0 0.0
    %503 = vmatpush1.msra.mxu0 0.0
    %504 = vmatprep.subr.mxu0 0.0
    %505 = vmatpush1.msra.mxu0 0.0
    %506 = vmatprep.subr.mxu0 0.0
    %507 = vmatpush1.msra.mxu0 0.0
    %508 = vmatprep.subr.mxu0 0.0
    %509 = vmatpush1.msra.mxu0 0.0
    %510 = vmatprep.subr.mxu0 0.0
    %511 = vmatpush1.msra.mxu0 0.0
    %512 = vmatprep.subr.mxu0 0.0
    %513 = vmatpush1.msra.mxu0 0.0
    %514 = vmatprep.subr.mxu0 0.0
    %515 = vmatpush1.msra.mxu0 0.0
    %516 = vmatprep.subr.mxu0 0.0
    %517 = vmatpush1.msra.mxu0 0.0
    %518 = vmatprep.subr.mxu0 0.0
    %519 = vmatpush1.msra.mxu0 0.0
    %520 = vmatprep.subr.mxu0 0.0
    %521 = vmatpush1.msra.mxu0 0.0
    %522 = vmatprep.subr.mxu0 0.0
    %523 = vmatpush1.msra.mxu0 0.0
    %524 = vmatprep.subr.mxu0 0.0
    %525 = vmatpush1.msra.mxu0 0.0
    %526 = vmatprep.subr.mxu0 0.0
    %527 = vmatpush1.msra.mxu0 0.0
    %528 = vmatprep.subr.mxu0 0.0
    %529 = vmatpush1.msra.mxu0 0.0
    %530 = vmatprep.subr.mxu0 0.0
    %531 = vmatpush1.msra.mxu0 0.0
    %532 = vmatprep.mubr.f32.mxu0 0.0
    %533 = vmatmul.mubr.f32.gmra.mrb[0].mxu0 %v442
    %v534 = vpop.f32.mrb[0].mxu0
    %v535 = vadd.f32 %v466, %v534
    %v536 = vpop.f32.mrb[0].mxu0
    %537 = vdwg.mxu0
    %vm538 = vcmask 64512
    %539 = vst.msk [vmem:[%s3] sm:$0xff] %vm538, %v535
    // Predicated region
    $region18: #{mlp_forward.1} parent=1 // pred_check
      _
    $region19: #{mlp_forward.1} parent=1 // pred_check_branch
      %541 = sbr.rel (0) target = $region21
    $region20: #{mlp_forward.1} parent=1 // pred_region
      _
    $region21: #{mlp_forward.1} parent=1 // pred_fallthru
      _
    // Predicated region
    $region22: #{mlp_forward.1} parent=1 // pred_check
      _
    $region23: #{mlp_forward.1} parent=1 // pred_check_branch
      %543 = sbr.rel (0) target = $region25
    $region24: #{mlp_forward.1} parent=1 // pred_region
      _
    $region25: #{mlp_forward.1} parent=1 // pred_fallthru
      _
    %544 = vsyncpa [#allocation3], 1

</llo_original>
